<compile_context>
chip_gen: v5e
topology: v5e:2x2
jax: 0.10.0
libtpu: 0.0.40
codegen_flags: <defaults>
</compile_context>

<pallas_src>
import jax
import jax.numpy as jnp
from jax import lax
from jax.experimental import pallas as pl
from jax.experimental.pallas import tpu as pltpu


_LANE = 128
_MAX_PIX_BLOCK = 1024  # cap the pixel block so realistic batches give >=2 parallel steps (v7x)


# --------------------------------------------------------------------------- #
# Kernels: fused (conv-as-matmul) + BN affine (+ residual) + ReLU
# --------------------------------------------------------------------------- #
def _conv_bn_relu_kernel(w_ref, p_ref, s_ref, b_ref, o_ref):
    # (Co, CK) @ (CK, TN) -> (Co, TN), then fused BN scale/shift + ReLU.
    acc = jnp.dot(w_ref[...], p_ref[...],
                  preferred_element_type=jnp.float32,
                  precision=lax.Precision.HIGHEST)
    acc = acc * s_ref[...] + b_ref[...]
    o_ref[...] = jnp.maximum(acc, 0.0).astype(o_ref.dtype)


def _conv_bn_add_relu_kernel(w_ref, p_ref, s_ref, b_ref, r_ref, o_ref):
    # Second conv fused with BN scale/shift, shortcut add and final ReLU.
    acc = jnp.dot(w_ref[...], p_ref[...],
                  preferred_element_type=jnp.float32,
                  precision=lax.Precision.HIGHEST)
    acc = acc * s_ref[...] + b_ref[...] + r_ref[...]
    o_ref[...] = jnp.maximum(acc, 0.0).astype(o_ref.dtype)


def _fused_conv_call(w2d, p2d, scale, bias, residual=None):
    """out[co, q] = relu(w2d @ p2d * scale + bias (+ residual)), lane-dense slabs."""
    co, ck = w2d.shape
    npix = p2d.shape[1]
    tn = min(pl.cdiv(npix, _LANE) * _LANE, _MAX_PIX_BLOCK)
    npix_pad = pl.cdiv(npix, tn) * tn
    if npix_pad != npix:
        p2d = jnp.pad(p2d, ((0, 0), (0, npix_pad - npix)))
        if residual is not None:
            residual = jnp.pad(residual, ((0, 0), (0, npix_pad - npix)))

    in_specs = [
        pl.BlockSpec((co, ck), lambda j: (0, 0)),   # weights: resident
        pl.BlockSpec((ck, tn), lambda j: (0, j)),   # patches: tiled on pixel axis
        pl.BlockSpec((co, 1), lambda j: (0, 0)),    # bn scale
        pl.BlockSpec((co, 1), lambda j: (0, 0)),    # bn bias
    ]
    args = [w2d, p2d, scale, bias]
    if residual is None:
        kernel = _conv_bn_relu_kernel
    else:
        kernel = _conv_bn_add_relu_kernel
        in_specs.append(pl.BlockSpec((co, tn), lambda j: (0, j)))
        args.append(residual)

    out = pl.pallas_call(
        kernel,
        out_shape=jax.ShapeDtypeStruct((co, npix_pad), p2d.dtype),
        grid=(npix_pad // tn,),
        in_specs=in_specs,
        out_specs=pl.BlockSpec((co, tn), lambda j: (0, j)),
        compiler_params=pltpu.CompilerParams(dimension_semantics=("parallel",)),
    )(*args)
    return out[:, :npix]


# --------------------------------------------------------------------------- #
# Wrapper-side layout plumbing (pure data movement, done by XLA)
# --------------------------------------------------------------------------- #
def _im2col_3x3(x, stride):
    """(N, C, H, W) -> (C*9, N*Ho*Wo) patches for a 3x3, pad=1 convolution."""
    n, c, h, w = x.shape
    ho = (h - 1) // stride + 1
    wo = (w - 1) // stride + 1
    xp = jnp.pad(x, ((0, 0), (0, 0), (1, 1), (1, 1)))
    taps = []
    for ky in range(3):
        for kx in range(3):
            t = lax.slice(
                xp,
                (0, 0, ky, kx),
                (n, c, ky + (ho - 1) * stride + 1, kx + (wo - 1) * stride + 1),
                (1, 1, stride, stride))                 # (N, C, Ho, Wo)
            taps.append(t)
    p = jnp.stack(taps, axis=0)                         # (9, N, C, Ho, Wo)
    p = p.transpose(2, 0, 1, 3, 4)                      # (C, 9, N, Ho, Wo)
    return p.reshape(c * 9, n * ho * wo), (ho, wo)


def _bn_scale_bias(gamma, beta, mean, var, eps):
    s = gamma / jnp.sqrt(var + eps)
    b = beta - mean * s
    return (s.reshape(-1, 1).astype(jnp.float32),
            b.reshape(-1, 1).astype(jnp.float32))


def basic_block_forward(x, params, *, stride=1, eps=1e-5):
    """ResNet BasicBlock forward (eval-mode BN), NCHW float32."""
    w1, g1, be1, m1, v1, w2, g2, be2, m2, v2 = params
    n, cin, h, w = x.shape
    planes = w1.shape[0]

    # conv1 (3x3, stride, pad 1) + bn1 + relu : one fused Pallas kernel
    p1, (ho, wo) = _im2col_3x3(x, stride)
    s1, b1 = _bn_scale_bias(g1, be1, m1, v1, eps)
    h1 = _fused_conv_call(w1.reshape(planes, cin * 9), p1, s1, b1)   # (planes, N*Ho*Wo)

    # Option-A shortcut: pure data movement (XLA slice + pad), fused into the
    # second kernel as an add -- no standalone shortcut kernel.
    if stride != 1 or cin != planes:
        pad = planes // 4
        sc = jnp.pad(x[:, :, ::2, ::2], ((0, 0), (pad, pad), (0, 0), (0, 0)))
    else:
        sc = x
    sc2d = sc.transpose(1, 0, 2, 3).reshape(planes, n * ho * wo)

    # conv2 (3x3, stride 1, pad 1) + bn2 + shortcut add + relu : second fused kernel
    h1_sp = h1.reshape(planes, n, ho, wo).transpose(1, 0, 2, 3)      # (N, planes, Ho, Wo)
    p2, _ = _im2col_3x3(h1_sp, 1)
    s2, b2 = _bn_scale_bias(g2, be2, m2, v2, eps)
    out2d = _fused_conv_call(w2.reshape(planes, planes * 9), p2, s2, b2, residual=sc2d)

    return out2d.reshape(planes, n, ho, wo).transpose(1, 0, 2, 3)


# --------------------------------------------------------------------------- #
# Pure-JAX reference (mirrors the PyTorch module in eval mode)
# --------------------------------------------------------------------------- #
def _reference(x, params, *, stride=1, eps=1e-5):
    w1, g1, be1, m1, v1, w2, g2, be2, m2, v2 = params

    def conv3x3(y, wgt, s):
        return lax.conv_general_dilated(
            y, wgt, window_strides=(s, s), padding=((1, 1), (1, 1)),
            dimension_numbers=("NCHW", "OIHW", "NCHW"),
            precision=lax.Precision.HIGHEST)

    def bn(y, g, b, m, v):
        inv = g / jnp.sqrt(v + eps)
        return y * inv[None, :, None, None] + (b - m * inv)[None, :, None, None]

    out = jax.nn.relu(bn(conv3x3(x, w1, stride), g1, be1, m1, v1))
    out = bn(conv3x3(out, w2, 1), g2, be2, m2, v2)
    planes = w1.shape[0]
    if stride != 1 or x.shape[1] != planes:
        pad = planes // 4
        sc = jnp.pad(x[:, :, ::2, ::2], ((0, 0), (pad, pad), (0, 0), (0, 0)))
    else:
        sc = x
    return jax.nn.relu(out + sc)


if __name__ == "__main__":
    key = jax.random.PRNGKey(0)
    n, cin, h, w = 2, 4, 16, 16
    planes, stride = 8, 2          # triggers the option-A downsampling shortcut
    ks = jax.random.split(key, 11)

    x = jax.random.normal(ks[0], (n, cin, h, w), jnp.float32)
    w1 = 0.2 * jax.random.normal(ks[1], (planes, cin, 3, 3), jnp.float32)
    w2 = 0.2 * jax.random.normal(ks[2], (planes, planes, 3, 3), jnp.float32)
    g1 = 1.0 + 0.1 * jax.random.normal(ks[3], (planes,), jnp.float32)
    be1 = 0.1 * jax.random.normal(ks[4], (planes,), jnp.float32)
    m1 = 0.1 * jax.random.normal(ks[5], (planes,), jnp.float32)
    v1 = 1.0 + 0.1 * jnp.abs(jax.random.normal(ks[6], (planes,), jnp.float32))
    g2 = 1.0 + 0.1 * jax.random.normal(ks[7], (planes,), jnp.float32)
    be2 = 0.1 * jax.random.normal(ks[8], (planes,), jnp.float32)
    m2 = 0.1 * jax.random.normal(ks[9], (planes,), jnp.float32)
    v2 = 1.0 + 0.1 * jnp.abs(jax.random.normal(ks[10], (planes,), jnp.float32))
    params = (w1, g1, be1, m1, v1, w2, g2, be2, m2, v2)

    out = basic_block_forward(x, params, stride=stride)
    out = jax.block_until_ready(out)

    ref = _reference(x, params, stride=stride)
    assert out.shape == ref.shape == (n, planes, h // stride, w // stride)
    assert out.dtype == x.dtype
    assert jnp.allclose(out, ref, atol=1e-3, rtol=1e-3), "mismatch vs reference"

    print("KERNEL_OK")
</pallas_src>

<mosaic_0001>
module attributes {stable_mosaic.version = 11 : i64} {
  func.func @_conv_bn_relu_kernel(%arg0: i32, %arg1: memref<8x36xf32, #tpu.memory_space<vmem>>, %arg2: memref<36x128xf32, #tpu.memory_space<vmem>>, %arg3: memref<8x1xf32, #tpu.memory_space<vmem>>, %arg4: memref<8x1xf32, #tpu.memory_space<vmem>>, %arg5: memref<8x128xf32, #tpu.memory_space<vmem>>) attributes {dimension_semantics = [#tpu.dimension_semantics<parallel>], iteration_bounds = array<i64: 1>, scalar_prefetch = 0 : i64, scratch_operands = 0 : i64, tpu.core_type = #tpu.core_type<tc>, window_params = [{pipeline_mode = #tpu.pipeline_mode<synchronous>, transform_indices = @transform_0, window_bounds = array<i64: 8, 36>}, {transform_indices = @transform_1, window_bounds = array<i64: 36, 128>}, {pipeline_mode = #tpu.pipeline_mode<synchronous>, transform_indices = @transform_2, window_bounds = array<i64: 8, 1>}, {pipeline_mode = #tpu.pipeline_mode<synchronous>, transform_indices = @transform_3, window_bounds = array<i64: 8, 1>}, {transform_indices = @transform_4, window_bounds = array<i64: 8, 128>}]} {
    %c0 = arith.constant 0 : index
    %c0_0 = arith.constant 0 : index
    %0 = vector.load %arg1[%c0, %c0_0] : memref<8x36xf32, #tpu.memory_space<vmem>>, vector<8x36xf32>
    %c0_1 = arith.constant 0 : index
    %c0_2 = arith.constant 0 : index
    %1 = vector.load %arg2[%c0_1, %c0_2] : memref<36x128xf32, #tpu.memory_space<vmem>>, vector<36x128xf32>
    %cst = arith.constant dense<0.000000e+00> : vector<8x128xf32>
    %2 = tpu.matmul %0, %1, %cst {dimension_numbers = #tpu.dot_dimension_numbers<[1], [0], [0], [1], [0, 0, 1, 1], [], []>, precision = #tpu.contract_precision<fp32>} : vector<8x36xf32>, vector<36x128xf32>, vector<8x128xf32> -> vector<8x128xf32>
    %c0_3 = arith.constant 0 : index
    %c0_4 = arith.constant 0 : index
    %3 = vector.load %arg3[%c0_3, %c0_4] : memref<8x1xf32, #tpu.memory_space<vmem>>, vector<8x1xf32>
    %4 = vector.broadcast %3 : vector<8x1xf32> to vector<8x128xf32>
    %5 = arith.mulf %2, %4 : vector<8x128xf32>
    %c0_5 = arith.constant 0 : index
    %c0_6 = arith.constant 0 : index
    %6 = vector.load %arg4[%c0_5, %c0_6] : memref<8x1xf32, #tpu.memory_space<vmem>>, vector<8x1xf32>
    %7 = vector.broadcast %6 : vector<8x1xf32> to vector<8x128xf32>
    %8 = arith.addf %5, %7 : vector<8x128xf32>
    %cst_7 = arith.constant 0.000000e+00 : f32
    %9 = vector.broadcast %cst_7 : f32 to vector<8x128xf32>
    %10 = arith.maximumf %8, %9 : vector<8x128xf32>
    %c0_8 = arith.constant 0 : index
    %c0_9 = arith.constant 0 : index
    %11 = vector.load %arg5[%c0_8, %c0_9] : memref<8x128xf32, #tpu.memory_space<vmem>>, vector<8x128xf32>
    tpu.vector_store %arg5[%c0_8, %c0_9], %10 {strides = array<i32>} : memref<8x128xf32, #tpu.memory_space<vmem>>, vector<8x128xf32>,
    return
  }
  func.func @transform_0(%arg0: i32) -> (i32, i32) {
    %c0_i32 = arith.constant 0 : i32
    %c0_i32_0 = arith.constant 0 : i32
    %c0_i32_1 = arith.constant 0 : i32
    return %c0_i32, %c0_i32_0 : i32, i32
  }
  func.func @transform_1(%arg0: i32) -> (i32, i32) {
    %c0_i32 = arith.constant 0 : i32
    %c0_i32_0 = arith.constant 0 : i32
    return %c0_i32, %arg0 : i32, i32
  }
  func.func @transform_2(%arg0: i32) -> (i32, i32) {
    %c0_i32 = arith.constant 0 : i32
    %c0_i32_0 = arith.constant 0 : i32
    %c0_i32_1 = arith.constant 0 : i32
    return %c0_i32, %c0_i32_0 : i32, i32
  }
  func.func @transform_3(%arg0: i32) -> (i32, i32) {
    %c0_i32 = arith.constant 0 : i32
    %c0_i32_0 = arith.constant 0 : i32
    %c0_i32_1 = arith.constant 0 : i32
    return %c0_i32, %c0_i32_0 : i32, i32
  }
  func.func @transform_4(%arg0: i32) -> (i32, i32) {
    %c0_i32 = arith.constant 0 : i32
    %c0_i32_0 = arith.constant 0 : i32
    return %c0_i32, %arg0 : i32, i32
  }
}

</mosaic_0001>

<llo_original>
// kernel: tpu_custom_call.1
$region0: #{tpu_custom_call.1}
  #allocation0 [shape = 'u32[]', space=smem, size = 0x4, offset = 0x4, fixed_abs, tag = 'smem constant byte address 0x4 - core index']
  #allocation1 [shape = 'u32[72,128]{1,0:T(1,128)}', space=vmem, size = 0x9000, scoped, tag = 'internal scratch']
  %s0 = inlined_call_operand.vmem [shape: f32[8,36], index: 0, kind: input, shape index: {}]
  %s1 = inlined_call_operand.hbm [shape: f32[36,128], index: 1, kind: input, shape index: {}]
  %s2 = inlined_call_operand.vmem [shape: f32[8,1], index: 2, kind: input, shape index: {}]
  %s3 = inlined_call_operand.vmem [shape: f32[8,1], index: 3, kind: input, shape index: {}]
  %s4 = inlined_call_operand.hbm [shape: f32[8,128], index: 4, kind: output, shape index: {}]
  %s5 = sld [smem:[#allocation0]]
  $region30: #{tpu_custom_call.1} parent=0
    _
  %s7 = ssub.s32 1, %s5
  %s8 = scalar_select 0, %s7, %s5
  $region1: #{tpu_custom_call.1} parent=0
    #allocation2 [shape = 'u8[20480]{0}', space=vmem, size = 0x5000, scoped, tag = 'input window, operand 1, single buffered']
    #allocation3 [shape = 's32[1]{0}', space=sflag, size = 0x4, scoped, tag = 'scoped memory for tpu_custom_call.1']
    #allocation4 [shape = 's32[1]{0}', space=sflag, size = 0x4, scoped, tag = 'scoped memory for tpu_custom_call.1']
    #allocation5 [shape = 'u8[4096]{0}', space=vmem, size = 0x1000, scoped, tag = 'output window, operand 0, single buffered']
    %9 = vsyncpa [#allocation3], 0
    %10 = vsyncpa [#allocation4], 0
    // Predicated region
    $region2: #{tpu_custom_call.1} parent=1 // pred_check
      _
    $region3: #{tpu_custom_call.1} parent=1 // pred_check_branch
      %12 = sbr.rel (0) target = $region5
    $region4: #{tpu_custom_call.1} parent=1 // pred_region
      _
    $region5: #{tpu_custom_call.1} parent=1 // pred_fallthru
      _
    // Predicated region
    $region6: #{tpu_custom_call.1} parent=1 // pred_check
      _
    $region7: #{tpu_custom_call.1} parent=1 // pred_check_branch
      %14 = sbr.rel (0) target = $region9
    $region8: #{tpu_custom_call.1} parent=1 // pred_region
      %16 = vsyncadd [#allocation3], 0
      %s17 = sshll.u32 %s1, 4
      %s18 = int_to_ptr.hbm [resolvable:$true] %s17
      %s19 = sshll.u32 [#allocation2], 4
      %s20 = int_to_ptr.vmem [resolvable:$true] %s19
      %25 = dma.hbm_to_vmem [thread:$0]  %s18, 640, %s20, [#allocation3], 128, 128, 8
    $region9: #{tpu_custom_call.1} parent=1 // pred_fallthru
      _
    // Predicated region
    $region10: #{tpu_custom_call.1} parent=1 // pred_check
      _
    $region11: #{tpu_custom_call.1} parent=1 // pred_check_branch
      %27 = sbr.rel (0) target = $region13
    $region12: #{tpu_custom_call.1} parent=1 // pred_region
      _
    $region13: #{tpu_custom_call.1} parent=1 // pred_fallthru
      _
    // Predicated region
    $region14: #{tpu_custom_call.1} parent=1 // pred_check
      _
    $region15: #{tpu_custom_call.1} parent=1 // pred_check_branch
      %29 = sbr.rel (0) target = $region17
    $region16: #{tpu_custom_call.1} parent=1 // pred_region
      _
    $region17: #{tpu_custom_call.1} parent=1 // pred_fallthru
      _
    // Predicated region
    $region18: #{tpu_custom_call.1} parent=1 // pred_check
      _
    $region19: #{tpu_custom_call.1} parent=1 // pred_check_branch
      %31 = sbr.rel (0) target = $region21
    $region20: #{tpu_custom_call.1} parent=1 // pred_region
      %33 = dma.done [#allocation3], 640
    $region21: #{tpu_custom_call.1} parent=1 // pred_fallthru
      _
    %v34 = vld [vmem:[%s0] sm:$0xff]
    %v35 = vld [vmem:[#allocation2] sm:$0xff]
    %v36 = vld [vmem:[#allocation2 + $0x8] sm:$0xff]
    %v37 = vld [vmem:[#allocation2 + $0x10] sm:$0xff]
    %v38 = vld [vmem:[#allocation2 + $0x18] sm:$0xff]
    %v39 = vld [vmem:[#allocation2 + $0x20] sm:$0xf]
    %vm40 = vcmask 293888
    %v42 = vsel %vm40, %v34, 0
    %vm44 = vcmask 1043456
    %v46 = vsel %vm44, %v39, 0
    %48 = vmatpush.msra.mxu0 0.0
    %49 = vmatpush.msra.mxu0 0.0
    %50 = vmatpush.msra.mxu0 0.0
    %51 = vmatpush.msra.mxu0 0.0
    %52 = vmatpush.msra.mxu0 0.0
    %53 = vmatpush.msra.mxu0 0.0
    %54 = vmatpush.msra.mxu0 0.0
    %55 = vmatpush.msra.mxu0 0.0
    %56 = vmatpush.msra.mxu0 0.0
    %57 = vmatpush.msra.mxu0 0.0
    %58 = vmatpush.msra.mxu0 0.0
    %v59 = vand.u32 %v46, 4294901760
    %60 = vmatpush.msra.mxu0 %v59
    %v61 = vand.u32 %v38, 4294901760
    %62 = vmatpush.msra.mxu0 %v61
    %v63 = vand.u32 %v37, 4294901760
    %64 = vmatpush.msra.mxu0 %v63
    %v65 = vand.u32 %v36, 4294901760
    %66 = vmatpush.msra.mxu0 %v65
    %v67 = vand.u32 %v35, 4294901760
    %68 = vmatpush.msra.mxu0 %v67
    %v69 = vand.u32 %v42, 4294901760
    %v70 = vsub.f32 %v42, %v69
    %v71 = vand.u32 %v70, 4294901760
    %v72 = vsub.f32 %v70, %v71
    %v73 = vand.u32 %v72, 4294901760
    %74 = vmatmul.f32.gmra.mxu0 %v73
    %v75 = vpop.f32.mrf.mxu0
    %v76 = vadd.f32 0.0, %v75
    %77 = vdwg.mxu0
    %78 = vmatpush.msra.mxu0 0.0
    %79 = vmatpush.msra.mxu0 0.0
    %80 = vmatpush.msra.mxu0 0.0
    %81 = vmatpush.msra.mxu0 0.0
    %82 = vmatpush.msra.mxu0 0.0
    %83 = vmatpush.msra.mxu0 0.0
    %84 = vmatpush.msra.mxu0 0.0
    %85 = vmatpush.msra.mxu0 0.0
    %86 = vmatpush.msra.mxu0 0.0
    %87 = vmatpush.msra.mxu0 0.0
    %88 = vmatpush.msra.mxu0 0.0
    %v89 = vand.u32 %v46, 4294901760
    %v90 = vsub.f32 %v46, %v89
    %v91 = vand.u32 %v90, 4294901760
    %v92 = vsub.f32 %v90, %v91
    %v93 = vand.u32 %v92, 4294901760
    %94 = vmatpush.msra.mxu0 %v93
    %v95 = vand.u32 %v38, 4294901760
    %v96 = vsub.f32 %v38, %v95
    %v97 = vand.u32 %v96, 4294901760
    %v98 = vsub.f32 %v96, %v97
    %v99 = vand.u32 %v98, 4294901760
    %100 = vmatpush.msra.mxu0 %v99
    %v101 = vand.u32 %v37, 4294901760
    %v102 = vsub.f32 %v37, %v101
    %v103 = vand.u32 %v102, 4294901760
    %v104 = vsub.f32 %v102, %v103
    %v105 = vand.u32 %v104, 4294901760
    %106 = vmatpush.msra.mxu0 %v105
    %v107 = vand.u32 %v36, 4294901760
    %v108 = vsub.f32 %v36, %v107
    %v109 = vand.u32 %v108, 4294901760
    %v110 = vsub.f32 %v108, %v109
    %v111 = vand.u32 %v110, 4294901760
    %112 = vmatpush.msra.mxu0 %v111
    %v113 = vand.u32 %v35, 4294901760
    %v114 = vsub.f32 %v35, %v113
    %v115 = vand.u32 %v114, 4294901760
    %v116 = vsub.f32 %v114, %v115
    %v117 = vand.u32 %v116, 4294901760
    %118 = vmatpush.msra.mxu0 %v117
    %v119 = vand.u32 %v42, 4294901760
    %120 = vmatmul.f32.gmra.mxu0 %v119
    %v121 = vpop.f32.mrf.mxu0
    %v122 = vadd.f32 %v76, %v121
    %123 = vdwg.mxu0
    %124 = vmatpush.msra.mxu0 0.0
    %125 = vmatpush.msra.mxu0 0.0
    %126 = vmatpush.msra.mxu0 0.0
    %127 = vmatpush.msra.mxu0 0.0
    %128 = vmatpush.msra.mxu0 0.0
    %129 = vmatpush.msra.mxu0 0.0
    %130 = vmatpush.msra.mxu0 0.0
    %131 = vmatpush.msra.mxu0 0.0
    %132 = vmatpush.msra.mxu0 0.0
    %133 = vmatpush.msra.mxu0 0.0
    %134 = vmatpush.msra.mxu0 0.0
    %v135 = vand.u32 %v46, 4294901760
    %v136 = vsub.f32 %v46, %v135
    %137 = vmatpush.msra.mxu0 %v136
    %v138 = vand.u32 %v38, 4294901760
    %v139 = vsub.f32 %v38, %v138
    %140 = vmatpush.msra.mxu0 %v139
    %v141 = vand.u32 %v37, 4294901760
    %v142 = vsub.f32 %v37, %v141
    %143 = vmatpush.msra.mxu0 %v142
    %v144 = vand.u32 %v36, 4294901760
    %v145 = vsub.f32 %v36, %v144
    %146 = vmatpush.msra.mxu0 %v145
    %v147 = vand.u32 %v35, 4294901760
    %v148 = vsub.f32 %v35, %v147
    %149 = vmatpush.msra.mxu0 %v148
    %v150 = vand.u32 %v42, 4294901760
    %v151 = vsub.f32 %v42, %v150
    %152 = vmatmul.f32.gmra.mxu0 %v151
    %v153 = vpop.f32.mrf.mxu0
    %v154 = vadd.f32 %v122, %v153
    %155 = vdwg.mxu0
    %156 = vmatpush.msra.mxu0 0.0
    %157 = vmatpush.msra.mxu0 0.0
    %158 = vmatpush.msra.mxu0 0.0
    %159 = vmatpush.msra.mxu0 0.0
    %160 = vmatpush.msra.mxu0 0.0
    %161 = vmatpush.msra.mxu0 0.0
    %162 = vmatpush.msra.mxu0 0.0
    %163 = vmatpush.msra.mxu0 0.0
    %164 = vmatpush.msra.mxu0 0.0
    %165 = vmatpush.msra.mxu0 0.0
    %166 = vmatpush.msra.mxu0 0.0
    %v167 = vand.u32 %v46, 4294901760
    %168 = vmatpush.msra.mxu0 %v167
    %v169 = vand.u32 %v38, 4294901760
    %170 = vmatpush.msra.mxu0 %v169
    %v171 = vand.u32 %v37, 4294901760
    %172 = vmatpush.msra.mxu0 %v171
    %v173 = vand.u32 %v36, 4294901760
    %174 = vmatpush.msra.mxu0 %v173
    %v175 = vand.u32 %v35, 4294901760
    %176 = vmatpush.msra.mxu0 %v175
    %v177 = vand.u32 %v42, 4294901760
    %v178 = vsub.f32 %v42, %v177
    %v179 = vand.u32 %v178, 4294901760
    %180 = vmatmul.f32.gmra.mxu0 %v179
    %v181 = vpop.f32.mrf.mxu0
    %v182 = vadd.f32 %v154, %v181
    %183 = vdwg.mxu0
    %184 = vmatpush.msra.mxu0 0.0
    %185 = vmatpush.msra.mxu0 0.0
    %186 = vmatpush.msra.mxu0 0.0
    %187 = vmatpush.msra.mxu0 0.0
    %188 = vmatpush.msra.mxu0 0.0
    %189 = vmatpush.msra.mxu0 0.0
    %190 = vmatpush.msra.mxu0 0.0
    %191 = vmatpush.msra.mxu0 0.0
    %192 = vmatpush.msra.mxu0 0.0
    %193 = vmatpush.msra.mxu0 0.0
    %194 = vmatpush.msra.mxu0 0.0
    %v195 = vand.u32 %v46, 4294901760
    %v196 = vsub.f32 %v46, %v195
    %v197 = vand.u32 %v196, 4294901760
    %198 = vmatpush.msra.mxu0 %v197
    %v199 = vand.u32 %v38, 4294901760
    %v200 = vsub.f32 %v38, %v199
    %v201 = vand.u32 %v200, 4294901760
    %202 = vmatpush.msra.mxu0 %v201
    %v203 = vand.u32 %v37, 4294901760
    %v204 = vsub.f32 %v37, %v203
    %v205 = vand.u32 %v204, 4294901760
    %206 = vmatpush.msra.mxu0 %v205
    %v207 = vand.u32 %v36, 4294901760
    %v208 = vsub.f32 %v36, %v207
    %v209 = vand.u32 %v208, 4294901760
    %210 = vmatpush.msra.mxu0 %v209
    %v211 = vand.u32 %v35, 4294901760
    %v212 = vsub.f32 %v35, %v211
    %v213 = vand.u32 %v212, 4294901760
    %214 = vmatpush.msra.mxu0 %v213
    %v215 = vand.u32 %v42, 4294901760
    %216 = vmatmul.f32.gmra.mxu0 %v215
    %v217 = vpop.f32.mrf.mxu0
    %v218 = vadd.f32 %v182, %v217
    %219 = vdwg.mxu0
    %220 = vmatpush.msra.mxu0 0.0
    %221 = vmatpush.msra.mxu0 0.0
    %222 = vmatpush.msra.mxu0 0.0
    %223 = vmatpush.msra.mxu0 0.0
    %224 = vmatpush.msra.mxu0 0.0
    %225 = vmatpush.msra.mxu0 0.0
    %226 = vmatpush.msra.mxu0 0.0
    %227 = vmatpush.msra.mxu0 0.0
    %228 = vmatpush.msra.mxu0 0.0
    %229 = vmatpush.msra.mxu0 0.0
    %230 = vmatpush.msra.mxu0 0.0
    %v231 = vand.u32 %v46, 4294901760
    %232 = vmatpush.msra.mxu0 %v231
    %v233 = vand.u32 %v38, 4294901760
    %234 = vmatpush.msra.mxu0 %v233
    %v235 = vand.u32 %v37, 4294901760
    %236 = vmatpush.msra.mxu0 %v235
    %v237 = vand.u32 %v36, 4294901760
    %238 = vmatpush.msra.mxu0 %v237
    %v239 = vand.u32 %v35, 4294901760
    %240 = vmatpush.msra.mxu0 %v239
    %v241 = vand.u32 %v42, 4294901760
    %242 = vmatmul.f32.gmra.mxu0 %v241
    %v243 = vpop.f32.mrf.mxu0
    %v244 = vadd.f32 %v218, %v243
    %245 = vdwg.mxu0
    %v246 = vld [vmem:[%s2] sm:$0xff]
    %248 = vset.pattern.permute.xlu0 0
    %249 = vperm.xlu0 %248, %v246
    %v250 = vpop.permute.xlu0 %249
    %v252 = vmul.f32 %v244, %v250
    %v253 = vld [vmem:[%s3] sm:$0xff]
    %255 = vset.pattern.permute.xlu0 0
    %256 = vperm.xlu0 %255, %v253
    %v257 = vpop.permute.xlu0 %256
    %v259 = vadd.f32 %v252, %v257
    %v260 = vmax.f32 %v259, 0.0
    %261 = vst [vmem:[#allocation5] sm:$0xff] %v260
    // Predicated region
    $region22: #{tpu_custom_call.1} parent=1 // pred_check
      _
    $region23: #{tpu_custom_call.1} parent=1 // pred_check_branch
      %263 = sbr.rel (0) target = $region25
    $region24: #{tpu_custom_call.1} parent=1 // pred_region
      %265 = vsyncadd [#allocation4], 0
      %s267 = sshll.u32 [#allocation5], 4
      %s268 = int_to_ptr.vmem [resolvable:$true] %s267
      %s269 = sshll.u32 %s4, 4
      %s270 = int_to_ptr.hbm [resolvable:$true] %s269
      %272 = dma.vmem_to_hbm [thread:$0]  %s268, 128, %s270, [#allocation4]
    $region25: #{tpu_custom_call.1} parent=1 // pred_fallthru
      _
    // Predicated region
    $region26: #{tpu_custom_call.1} parent=1 // pred_check
      _
    $region27: #{tpu_custom_call.1} parent=1 // pred_check_branch
      %274 = sbr.rel (0) target = $region29
    $region28: #{tpu_custom_call.1} parent=1 // pred_region
      %276 = dma.done [#allocation4], 128
    $region29: #{tpu_custom_call.1} parent=1 // pred_fallthru
      _
    %277 = vsyncpa [#allocation3], 1
    %278 = vsyncpa [#allocation4], 1

</llo_original>
